<compile_context>
chip_gen: v6e
topology: v6e:2x2x1
jax: 0.10.0
libtpu: 0.0.40
codegen_flags: <defaults>
</compile_context>

<pallas_src>
import jax
import jax.numpy as jnp
from jax.experimental import pallas as pl
from jax.experimental.pallas import tpu as pltpu


# Max lanes per grid step.  Double-buffered VMEM footprint (with 8-sublane
# padding of both the input and output blocks) is 16 MiB at 131072 lanes,
# which fits under the 32 MiB scoped-VMEM limit we request below on all of
# v5e / v6e / v7x.
_TILE_HW_MAX = 131072


def _fused_kernel(x_ref, w_ref, b_ref, o_ref):
    # x_ref: (C, T) f32 VMEM (streamed)      w_ref: (C, 1) f32 VMEM (resident)
    # b_ref: (1, 1) f32 SMEM (scalar bias)   o_ref: (1, T) f32 VMEM
    y = jnp.maximum(x_ref[...], 0.0)                        # ReLU (VPU)
    # Per-pixel weighted sum over the 4 input channels (VPU mul + sublane reduce).
    acc = jnp.sum(w_ref[...] * y, axis=0, keepdims=True)    # (1, T)
    o_ref[...] = acc + b_ref[0, 0]


def model_forward(x_nchw, params):
    """x_nchw: (N, 4, H, W) float32 -> (N, 1, H, W) float32."""
    w1, b1, w2, b2, w3, b3 = params
    N, C, H, W = x_nchw.shape
    HW = H * W

    # Fuse the affine chain in the wrapper (tiny, done once).
    w_fused = (w1 @ w2 @ w3).astype(jnp.float32)                         # (C, 1)
    b_fused = ((b1 @ w2 + b2) @ w3 + b3).reshape(1, 1).astype(jnp.float32)

    # Free, contiguous view of NCHW -> (N, C, H*W).  No transpose, no pad.
    x_v = x_nchw.reshape(N, C, HW)

    # Full-extent HW block when it fits (always legal regardless of 128
    # alignment); otherwise a 128-aligned cap with a partial last block.
    tile_hw = HW if HW <= _TILE_HW_MAX else _TILE_HW_MAX
    grid = (N, pl.cdiv(HW, tile_hw))

    flops = 2 * N * HW * C
    bytes_accessed = 4 * N * HW * (C + 1)   # f32 in + f32 out

    out = pl.pallas_call(
        _fused_kernel,
        out_shape=jax.ShapeDtypeStruct((N, 1, HW), jnp.float32),
        grid=grid,
        in_specs=[
            # Streamed input: one image's channels x a lane tile of pixels.
            pl.BlockSpec((None, C, tile_hw), lambda n, j: (n, 0, j)),
            # Resident fused weight (constant block index -> fetched once).
            pl.BlockSpec((C, 1), lambda n, j: (0, 0)),
            # Scalar fused bias in SMEM.
            pl.BlockSpec(memory_space=pltpu.MemorySpace.SMEM),
        ],
        out_specs=pl.BlockSpec((None, 1, tile_hw), lambda n, j: (n, 0, j)),
        compiler_params=pltpu.CompilerParams(
            dimension_semantics=("parallel", "parallel"),
            vmem_limit_bytes=32 * 1024 * 1024,
        ),
        cost_estimate=pl.CostEstimate(
            flops=flops, transcendentals=0, bytes_accessed=bytes_accessed
        ),
    )(x_v, w_fused, b_fused)

    # (N, 1, HW) -> (N, 1, H, W): free, contiguous reshape.
    return out.reshape(N, 1, H, W)


def init_params(key):
    # Conv2d(4,5,1) -> (Cin, Cout) matmul weights; Conv2d(5,8,1); Conv2d(8,1,1).
    k1, k2, k3, k4, k5, k6 = jax.random.split(key, 6)
    w1 = jax.random.normal(k1, (4, 5), jnp.float32) * 0.5
    b1 = jax.random.normal(k2, (5,), jnp.float32) * 0.1
    w2 = jax.random.normal(k3, (5, 8), jnp.float32) * 0.5
    b2 = jax.random.normal(k4, (8,), jnp.float32) * 0.1
    w3 = jax.random.normal(k5, (8, 1), jnp.float32) * 0.5
    b3 = jax.random.normal(k6, (1,), jnp.float32) * 0.1
    return (w1, b1, w2, b2, w3, b3)


def reference_forward(x_nchw, params):
    w1, b1, w2, b2, w3, b3 = params
    y = jnp.maximum(x_nchw, 0.0)
    y = jnp.einsum("nchw,cd->ndhw", y, w1) + b1[None, :, None, None]
    y = jnp.einsum("nchw,cd->ndhw", y, w2) + b2[None, :, None, None]
    y = jnp.einsum("nchw,cd->ndhw", y, w3) + b3[None, :, None, None]
    return y


if __name__ == "__main__":
    key = jax.random.PRNGKey(0)
    kx, kp = jax.random.split(key)

    x = jax.random.normal(kx, (2, 4, 16, 16), jnp.float32)
    params = init_params(kp)

    out = model_forward(x, params)
    out = jax.block_until_ready(out)

    ref = reference_forward(x, params)
    assert out.shape == (2, 1, 16, 16), out.shape
    assert jnp.allclose(out, ref, atol=1e-4, rtol=1e-4), "mismatch vs reference"

    print("KERNEL_OK")
</pallas_src>

<mosaic_0001>
module attributes {stable_mosaic.version = 11 : i64} {
  func.func @_fused_kernel(%arg0: i32, %arg1: i32, %arg2: memref<1x4x256xf32, #tpu.memory_space<vmem>>, %arg3: memref<4x1xf32, #tpu.memory_space<vmem>>, %arg4: memref<1x1xf32, #tpu.memory_space<smem>>, %arg5: memref<1x1x256xf32, #tpu.memory_space<vmem>>) attributes {dimension_semantics = [#tpu.dimension_semantics<parallel>, #tpu.dimension_semantics<parallel>], iteration_bounds = array<i64: 2, 1>, scalar_prefetch = 0 : i64, scratch_operands = 0 : i64, tpu.core_type = #tpu.core_type<tc>, window_params = [{transform_indices = @transform_0, window_bounds = array<i64: 1, 4, 256>}, {pipeline_mode = #tpu.pipeline_mode<synchronous>, transform_indices = @transform_1, window_bounds = array<i64: 4, 1>}, {transform_indices = @transform_2, window_bounds = array<i64: 1, 1>}, {transform_indices = @transform_3, window_bounds = array<i64: 1, 1, 256>}]} {
    %c0 = arith.constant 0 : index
    %c0_0 = arith.constant 0 : index
    %c0_1 = arith.constant 0 : index
    %0 = vector.load %arg2[%c0, %c0_0, %c0_1] : memref<1x4x256xf32, #tpu.memory_space<vmem>>, vector<1x4x256xf32>
    %1 = vector.shape_cast %0 : vector<1x4x256xf32> to vector<4x256xf32>
    %cst = arith.constant 0.000000e+00 : f32
    %2 = vector.broadcast %cst : f32 to vector<4x256xf32>
    %3 = arith.maximumf %1, %2 : vector<4x256xf32>
    %c0_2 = arith.constant 0 : index
    %c0_3 = arith.constant 0 : index
    %4 = vector.load %arg3[%c0_2, %c0_3] : memref<4x1xf32, #tpu.memory_space<vmem>>, vector<4x1xf32>
    %5 = vector.broadcast %4 : vector<4x1xf32> to vector<4x256xf32>
    %6 = arith.mulf %5, %3 : vector<4x256xf32>
    %cst_4 = arith.constant dense<0.000000e+00> : vector<256xf32>
    %7 = vector.multi_reduction <add>, %6, %cst_4 [0] : vector<4x256xf32> to vector<256xf32>
    %8 = vector.shape_cast %7 : vector<256xf32> to vector<1x256xf32>
    %c0_5 = arith.constant 0 : index
    %c0_6 = arith.constant 0 : index
    %9 = memref.load %arg4[%c0_5, %c0_6] : memref<1x1xf32, #tpu.memory_space<smem>>
    %10 = vector.broadcast %9 : f32 to vector<1x256xf32>
    %11 = arith.addf %8, %10 : vector<1x256xf32>
    %c0_7 = arith.constant 0 : index
    %c0_8 = arith.constant 0 : index
    %c0_9 = arith.constant 0 : index
    %12 = vector.load %arg5[%c0_7, %c0_8, %c0_9] : memref<1x1x256xf32, #tpu.memory_space<vmem>>, vector<1x1x256xf32>
    %13 = vector.shape_cast %12 : vector<1x1x256xf32> to vector<1x256xf32>
    %14 = vector.shape_cast %11 : vector<1x256xf32> to vector<1x1x256xf32>
    tpu.vector_store %arg5[%c0_7, %c0_8, %c0_9], %14 {strides = array<i32>} : memref<1x1x256xf32, #tpu.memory_space<vmem>>, vector<1x1x256xf32>,
    return
  }
  func.func @transform_0(%arg0: i32, %arg1: i32) -> (i32, i32, i32) {
    %c0_i32 = arith.constant 0 : i32
    %c0_i32_0 = arith.constant 0 : i32
    return %arg0, %c0_i32, %arg1 : i32, i32, i32
  }
  func.func @transform_1(%arg0: i32, %arg1: i32) -> (i32, i32) {
    %c0_i32 = arith.constant 0 : i32
    %c0_i32_0 = arith.constant 0 : i32
    %c0_i32_1 = arith.constant 0 : i32
    return %c0_i32, %c0_i32_0 : i32, i32
  }
  func.func @transform_2(%arg0: i32, %arg1: i32) -> (i32, i32) {
    %c0_i32 = arith.constant 0 : i32
    %c0_i32_0 = arith.constant 0 : i32
    %c0_i32_1 = arith.constant 0 : i32
    return %c0_i32, %c0_i32_0 : i32, i32
  }
  func.func @transform_3(%arg0: i32, %arg1: i32) -> (i32, i32, i32) {
    %c0_i32 = arith.constant 0 : i32
    %c0_i32_0 = arith.constant 0 : i32
    return %arg0, %c0_i32, %arg1 : i32, i32, i32
  }
}

</mosaic_0001>

<llo_original>
// kernel: tpu_custom_call.1
$region0: #{tpu_custom_call.1}
  #allocation0 [shape = 'u32[]', space=smem, size = 0x4, offset = 0x4, fixed_abs, tag = 'smem constant byte address 0x4 - core index']
  #allocation1 [shape = 'u32[144,128]{1,0:T(1,128)}', space=vmem, size = 0x12000, scoped, tag = 'internal scratch']
  #allocation2 [shape = 'f32[1,1]{1,0:T(1,128)S(6)}', space=smem, size = 0x200, scoped, tag = 'scoped memory for tpu_custom_call.1']
  %s0 = inlined_call_operand.hbm [shape: f32[2,4,256], index: 0, kind: input, shape index: {}]
  %s1 = inlined_call_operand.vmem [shape: f32[4,1], index: 1, kind: input, shape index: {}]
  %s2 = inlined_call_operand.<no memory space> [shape: f32[1,1], index: 2, kind: input, shape index: {}]
  %s3 = inlined_call_operand.hbm [shape: f32[2,1,256], index: 3, kind: output, shape index: {}]
  %s4 = sld [smem:[#allocation0]]
  $region49: #{tpu_custom_call.1} parent=0
    _
  %s6 = ssub.s32 1, %s4
  %s7 = scalar_select 0, %s6, %s4
  %8 = sst [smem:[#allocation2]] %s2
  $region1: #{tpu_custom_call.1} parent=0
    #allocation3 [shape = 'u8[8192]{0}', space=vmem, size = 0x2000, scoped, tag = 'input window, operand 0']
    #allocation4 [shape = 's32[2]{0}', space=sflag, size = 0x8, scoped, tag = 'scoped memory for tpu_custom_call.1']
    #allocation5 [shape = 's32[2]{0}', space=sflag, size = 0x8, scoped, tag = 'scoped memory for tpu_custom_call.1']
    #allocation6 [shape = 'u8[2048]{0}', space=vmem, size = 0x800, scoped, tag = 'output window, operand 0']
    %9 = vsyncpa [#allocation4], 0
    %s10 = scalar_lea.sflag [#allocation4], 1
    %11 = vsyncpa %s10, 0
    %12 = vsyncpa [#allocation5], 0
    %s13 = scalar_lea.sflag [#allocation5], 1
    %14 = vsyncpa %s13, 0
    loop: start=0, step=1, limit=4
    $region2: #{tpu_custom_call.1} parent=1 // loop_pre_header
      _
    $region3: #{tpu_custom_call.1} parent=1 // loop_header
      %s16 = sphi 0, %s20
      %p17 = scmp.ge.s32.totalorder %s16, 4
      %s23 = sphi 0, %s35
      %s24 = sphi 0, %s31
      %s25 = sphi 0, %s23
      %s26 = sphi 0, %s24
      %s27 = sphi 0, %s25
      %s28 = sphi 0, %s26
      %s40 = sphi 0, %s42
      %s43 = sphi 0, %s40
      %s44 = sphi 0, %s43
      %s60 = sphi 0, %s44
      %s64 = sphi 0, %s64
      %s66 = sphi 0, %s64
      %s67 = sphi 0, %s66
      %s81 = sphi 0, %s67
      %s85 = sphi 0, %s85
      %s87 = sphi 0, %s85
      %s88 = sphi 0, %s87
      %s102 = sphi 0, %s88
      %s110 = sphi 0, %s112
      %s113 = sphi 0, %s110
      %s114 = sphi 0, %s113
      %s130 = sphi 0, %s114
    $region4: #{tpu_custom_call.1} parent=1 // loop_header_branch
      %19 = sbr.rel (%p17) target = $region8
    $region5: #{tpu_custom_call.1} parent=1 // loop_body
      %s21 = ssub.s32 %s16, 1
      %s22 = ssub.s32 %s16, 2
      %s29 = sadd.s32 1, %s24
      %p30 = scmp.ge.s32.totalorder %s29, 1
      %s31 = scalar_select %p30, 0, %s29
      %s32 = sadd.s32 1, %s23
      %s33 = scalar_select %p30, %s32, %s23
      %p34 = scmp.ge.s32.totalorder %s33, 2
      %s35 = scalar_select %p34, 0, %s33
      %s36 = ssub.s32 %s23, %s35
      %s37 = ssub.s32 %s24, %s31
      %s38 = sor.u32 %s36, %s37
      %p39 = scmp.eq.s32.totalorder %s38, 0
      %s41 = sadd.s32 %s40, 1
      %s42 = scalar_select %p39, %s40, %s41
      %p45 = pneg %p39
      %p46 = scmp.eq.s32.totalorder %s16, 1
      %p47 = por %p45, %p46
      %p48 = scmp.ne.s32.totalorder %s40, %s43
      %p49 = scmp.eq.s32.totalorder %s16, 0
      %p50 = por %p48, %p49
      %p51 = scmp.ne.s32.totalorder %s40, %s43
      %p52 = scmp.eq.s32.totalorder %s21, 1
      %p53 = por %p51, %p52
      %p54 = scmp.ne.s32.totalorder %s43, %s44
      %p55 = scmp.eq.s32.totalorder %s21, 0
      %p56 = por %p54, %p55
      %p57 = scmp.ne.s32.totalorder %s43, %s44
      %p58 = scmp.eq.s32.totalorder %s22, 1
      %p59 = por %p57, %p58
      %p61 = scmp.ne.s32.totalorder %s44, %s60
      %p62 = scmp.eq.s32.totalorder %s22, 0
      %p63 = por %p61, %p62
      %s65 = sadd.s32 %s64, 1
      %p68 = scmp.eq.s32.totalorder %s16, 1
      %p69 = scmp.ne.s32.totalorder %s64, %s66
      %p70 = scmp.eq.s32.totalorder %s16, 0
      %p71 = por %p69, %p70
      %p72 = scmp.ne.s32.totalorder %s64, %s66
      %p73 = scmp.eq.s32.totalorder %s21, 1
      %p74 = por %p72, %p73
      %p75 = scmp.ne.s32.totalorder %s66, %s67
      %p76 = scmp.eq.s32.totalorder %s21, 0
      %p77 = por %p75, %p76
      %p78 = scmp.ne.s32.totalorder %s66, %s67
      %p79 = scmp.eq.s32.totalorder %s22, 1
      %p80 = por %p78, %p79
      %p82 = scmp.ne.s32.totalorder %s67, %s81
      %p83 = scmp.eq.s32.totalorder %s22, 0
      %p84 = por %p82, %p83
      %s86 = sadd.s32 %s85, 1
      %p89 = scmp.eq.s32.totalorder %s16, 1
      %p90 = scmp.ne.s32.totalorder %s85, %s87
      %p91 = scmp.eq.s32.totalorder %s16, 0
      %p92 = por %p90, %p91
      %p93 = scmp.ne.s32.totalorder %s85, %s87
      %p94 = scmp.eq.s32.totalorder %s21, 1
      %p95 = por %p93, %p94
      %p96 = scmp.ne.s32.totalorder %s87, %s88
      %p97 = scmp.eq.s32.totalorder %s21, 0
      %p98 = por %p96, %p97
      %p99 = scmp.ne.s32.totalorder %s87, %s88
      %p100 = scmp.eq.s32.totalorder %s22, 1
      %p101 = por %p99, %p100
      %p103 = scmp.ne.s32.totalorder %s88, %s102
      %p104 = scmp.eq.s32.totalorder %s22, 0
      %p105 = por %p103, %p104
      %s106 = ssub.s32 %s23, %s35
      %s107 = ssub.s32 %s24, %s31
      %s108 = sor.u32 %s106, %s107
      %p109 = scmp.eq.s32.totalorder %s108, 0
      %s111 = sadd.s32 %s110, 1
      %s112 = scalar_select %p109, %s110, %s111
      %p115 = pneg %p109
      %p116 = scmp.eq.s32.totalorder %s16, 1
      %p117 = por %p115, %p116
      %p118 = scmp.ne.s32.totalorder %s110, %s113
      %p119 = scmp.eq.s32.totalorder %s16, 0
      %p120 = por %p118, %p119
      %p121 = scmp.ne.s32.totalorder %s110, %s113
      %p122 = scmp.eq.s32.totalorder %s21, 1
      %p123 = por %p121, %p122
      %p124 = scmp.ne.s32.totalorder %s113, %s114
      %p125 = scmp.eq.s32.totalorder %s21, 0
      %p126 = por %p124, %p125
      %p127 = scmp.ne.s32.totalorder %s113, %s114
      %p128 = scmp.eq.s32.totalorder %s22, 1
      %p129 = por %p127, %p128
      %p131 = scmp.ne.s32.totalorder %s114, %s130
      %p132 = scmp.eq.s32.totalorder %s22, 0
      %p133 = por %p131, %p132
      %p134 = scmp.le.s32.totalorder 1, %s16
      %p135 = scmp.lt.s32.totalorder %s16, 3
      %p136 = pnand %p134, %p135
      %p137 = pneg %p136
      // Predicated region
      $region9: #{tpu_custom_call.1} parent=5 // pred_check
        _
      $region10: #{tpu_custom_call.1} parent=5 // pred_check_branch
        %139 = sbr.rel (%p136) target = $region12
      $region11: #{tpu_custom_call.1} parent=5 // pred_region
        %s140 = ssub.s32 %s16, 1
        // Predicated region
        $region13: #{tpu_custom_call.1} parent=11 // pred_check
          %p141 = pneg %p77
        $region14: #{tpu_custom_call.1} parent=11 // pred_check_branch
          %143 = sbr.rel (%p141) target = $region16
        $region15: #{tpu_custom_call.1} parent=11 // pred_region
          _
        $region16: #{tpu_custom_call.1} parent=11 // pred_fallthru
          _
        // Predicated region
        $region17: #{tpu_custom_call.1} parent=11 // pred_check
          %p144 = pneg %p98
        $region18: #{tpu_custom_call.1} parent=11 // pred_check_branch
          %146 = sbr.rel (%p144) target = $region20
        $region19: #{tpu_custom_call.1} parent=11 // pred_region
          _
        $region20: #{tpu_custom_call.1} parent=11 // pred_fallthru
          _
      $region12: #{tpu_custom_call.1} parent=5 // pred_fallthru
        _
      %p147 = scmp.lt.s32.totalorder %s16, 2
      // Predicated region
      $region21: #{tpu_custom_call.1} parent=5 // pred_check
        %p148 = pneg %p147
      $region22: #{tpu_custom_call.1} parent=5 // pred_check_branch
        %150 = sbr.rel (%p148) target = $region24
      $region23: #{tpu_custom_call.1} parent=5 // pred_region
        // Predicated region
        $region25: #{tpu_custom_call.1} parent=23 // pred_check
          %p151 = pneg %p50
        $region26: #{tpu_custom_call.1} parent=23 // pred_check_branch
          %153 = sbr.rel (%p151) target = $region28
        $region27: #{tpu_custom_call.1} parent=23 // pred_region
          %s154 = sand.u32 %s40, 1
          %s155 = scalar_lea.sflag [#allocation4], %s154
          %s156 = sand.u32 %s40, 1
          %s157 = smul.addr %s156, 8
          %s158 = scalar_lea.vmem [#allocation3], %s157
          %s159 = smul.u32 2, %s24
          %s161 = ssub.s32 128, 128
          %162 = vsyncadd %s155, %s161
          %s163 = smul.addr %s23, 2
          %s164 = sadd.s32 %s159, %s163
          %s165 = smul.addr %s164, 64
          %s166 = scalar_lea.hbm %s0, %s165
          %s168 = sshll.u32 %s158, 4
          %s169 = int_to_ptr.vmem [resolvable:$true] %s168
          %171 = dma.hbm_to_vmem [thread:$0]  %s166, 128, %s169, %s155
        $region28: #{tpu_custom_call.1} parent=23 // pred_fallthru
          _
      $region24: #{tpu_custom_call.1} parent=5 // pred_fallthru
        _
      %p172 = scmp.le.s32.totalorder 1, %s16
      %p173 = scmp.lt.s32.totalorder %s16, 3
      %p174 = pnand %p172, %p173
      %p175 = pneg %p174
      // Predicated region
      $region29: #{tpu_custom_call.1} parent=5 // pred_check
        _
      $region30: #{tpu_custom_call.1} parent=5 // pred_check_branch
        %177 = sbr.rel (%p174) target = $region32
      $region31: #{tpu_custom_call.1} parent=5 // pred_region
        %s178 = ssub.s32 %s16, 1
        %s179 = sand.u32 %s43, 1
        %s180 = scalar_lea.sflag [#allocation4], %s179
        %s181 = sand.u32 %s43, 1
        %s182 = smul.addr %s181, 8
        %s183 = scalar_lea.vmem [#allocation3], %s182
        // Predicated region
        $region33: #{tpu_custom_call.1} parent=31 // pred_check
          %p184 = pneg %p56
        $region34: #{tpu_custom_call.1} parent=31 // pred_check_branch
          %186 = sbr.rel (%p184) target = $region36
        $region35: #{tpu_custom_call.1} parent=31 // pred_region
          %187 = dma.done %s180, 128
        $region36: #{tpu_custom_call.1} parent=31 // pred_fallthru
          _
        %s188 = sand.u32 %s43, 1
        %s189 = scalar_lea.sflag [#allocation4], %s188
        %s190 = sand.u32 %s43, 1
        %s191 = smul.addr %s190, 8
        %s192 = scalar_lea.vmem [#allocation3], %s191
        %p193 = pneg %p56
        %p194 = pneg %p53
        %p195 = pneg %p77
        %p196 = pneg %p74
        %p197 = pneg %p98
        %p198 = pneg %p95
        %p199 = pneg %p126
        %p200 = pneg %p123
        %s201 = sand.u32 %s113, 1
        %s202 = scalar_lea.sflag [#allocation5], %s201
        %s203 = sand.u32 %s113, 1
        %s204 = smul.addr %s203, 2
        %s205 = scalar_lea.vmem [#allocation6], %s204
        %s206 = smul.u32 2, %s26
        %s207 = smul.u32 2, %s26
        %v208 = vld [vmem:[%s183] sm:$0xff]
        %v209 = vmax.f32 %v208, 0.0
        %v210 = vld [vmem:[%s1] sm:$0xf]
        %212 = vset.pattern.permute.xlu0 0
        %213 = vperm.xlu0 %212, %v210
        %v214 = vpop.permute.xlu0 %213
        %v217 = vcombine.high %v209, %v209
        %v219 = vmul.f32 %v214, %v209
        %v220 = vmul.f32 %v214, %v217
        %vm221 = vcmask 1043456
        %v222 = vsel %vm221, %v219, 0.0
        %v223 = vrot.slane %v222, 4
        %v224 = vadd.f32 %v222, %v223
        %v225 = vrot.slane %v224, 2
        %v226 = vadd.f32 %v224, %v225
        %v227 = vrot.slane %v226, 1
        %v228 = vadd.f32 %v226, %v227
        %v229 = vsel %vm221, %v220, 0.0
        %v230 = vrot.slane %v229, 4
        %v231 = vadd.f32 %v229, %v230
        %v232 = vrot.slane %v231, 2
        %v233 = vadd.f32 %v231, %v232
        %v234 = vrot.slane %v233, 1
        %v235 = vadd.f32 %v233, %v234
        %s236 = sld [smem:[#allocation2]]
        %v237 = vstv %s236
        %v238 = vadd.f32 %v228, %v237
        %v239 = vadd.f32 %v235, %v237
        %v242 = vcombine.low %v238, %v239
        %v244 = vunpack.c.l.s4 1966171168
        %v245 = vunpack.c.0.s8 %v244
        %v246 = vlaneseq
        %v247 = vshrl.u32 %v246, 7
        %v248 = vsub.s32 %v245, %v247
        %v249 = vrot.slane %v242, %v248
        %v251 = vunpack.c.l.s4 1966171168
        %v252 = vunpack.c.0.s8 %v251
        %v253 = vlaneseq
        %v254 = vshrl.u32 %v253, 7
        %v255 = vsub.s32 %v252, %v254
        %v256 = vrot.slane %v249, %v255
        %v258 = vlaneseq
        %vm259 = vcmp.ge.s32.totalorder %v258, 0
        %vm260 = vcmp.lt.s32.totalorder %v258, 256
        %vm261 = vmand %vm259, %vm260
        %262 = vst.msk [vmem:[%s205] sm:$0x3] %vm261, %v256
        %s263 = sand.u32 %s113, 1
        %s264 = scalar_lea.sflag [#allocation5], %s263
        %s265 = sand.u32 %s113, 1
        %s266 = smul.addr %s265, 2
        %s267 = scalar_lea.vmem [#allocation6], %s266
        // Predicated region
        $region37: #{tpu_custom_call.1} parent=31 // pred_check
          %p268 = pneg %p123
        $region38: #{tpu_custom_call.1} parent=31 // pred_check_branch
          %270 = sbr.rel (%p268) target = $region40
        $region39: #{tpu_custom_call.1} parent=31 // pred_region
          %s271 = smul.u32 2, %s26
          %s273 = ssub.s32 32, 32
          %274 = vsyncadd %s264, %s273
          %s275 = smul.addr %s25, 2
          %s276 = sadd.s32 %s271, %s275
          %s277 = smul.addr %s276, 16
          %s278 = scalar_lea.hbm %s3, %s277
          %s280 = sshll.u32 %s267, 4
          %s281 = int_to_ptr.vmem [resolvable:$true] %s280
          %283 = dma.vmem_to_hbm [thread:$0]  %s281, 32, %s278, %s264
        $region40: #{tpu_custom_call.1} parent=31 // pred_fallthru
          _
      $region32: #{tpu_custom_call.1} parent=5 // pred_fallthru
        _
      %p284 = scmp.le.s32.totalorder 2, %s16
      // Predicated region
      $region41: #{tpu_custom_call.1} parent=5 // pred_check
        %p285 = pneg %p284
      $region42: #{tpu_custom_call.1} parent=5 // pred_check_branch
        %287 = sbr.rel (%p285) target = $region44
      $region43: #{tpu_custom_call.1} parent=5 // pred_region
        %s288 = ssub.s32 %s16, 2
        // Predicated region
        $region45: #{tpu_custom_call.1} parent=43 // pred_check
          %p289 = pneg %p129
        $region46: #{tpu_custom_call.1} parent=43 // pred_check_branch
          %291 = sbr.rel (%p289) target = $region48
        $region47: #{tpu_custom_call.1} parent=43 // pred_region
          %s292 = sand.u32 %s114, 1
          %s293 = scalar_lea.sflag [#allocation5], %s292
          %s294 = sand.u32 %s114, 1
          %s295 = smul.addr %s294, 2
          %s296 = scalar_lea.vmem [#allocation6], %s295
          %297 = dma.done %s293, 32
        $region48: #{tpu_custom_call.1} parent=43 // pred_fallthru
          _
      $region44: #{tpu_custom_call.1} parent=5 // pred_fallthru
        _
    $region6: #{tpu_custom_call.1} parent=1 // loop_footer
      %s20 = sadd.s32 1, %s16
    $region7: #{tpu_custom_call.1} parent=1 // loop_footer_branch
      %15 = sbr.rel target = $region3
    $region8: #{tpu_custom_call.1} parent=1 // loop_exit
      _
    %298 = vsyncpa [#allocation4], 1
    %s299 = scalar_lea.sflag [#allocation4], 1
    %300 = vsyncpa %s299, 1
    %301 = vsyncpa [#allocation5], 1
    %s302 = scalar_lea.sflag [#allocation5], 1
    %303 = vsyncpa %s302, 1

</llo_original>
